<compile_context>
chip_gen: v7x
topology: tpu7x:2x2x1
jax: 0.10.0
libtpu: 0.0.40
codegen_flags: <defaults>
</compile_context>

<pallas_src>
import functools

import jax
import jax.numpy as jnp
from jax import lax
from jax.experimental import pallas as pl
from jax.experimental.pallas import tpu as pltpu


def _conv_margins(k, p, w):
    """Left/right lane margins needed for shift-based im2col of a kxk, pad-p
    conv on a flat (row-major, width w) plane."""
    return p * (w + 1), (k - 1 - p) * (w + 1)


def fused_double_conv_kernel(x_ref, w1_ref, b1_ref, w2_ref, b2_ref,
                             m1_ref, m2_ref, *rest,
                             Cin, Cout, K1, pad, W, Wo, HW, L2, use_sel):
    """One grid step = one image.  All planes are (channels, flat_spatial) with
    the flat spatial dim on lanes.

    x_ref  : (1, Cin, H*W)        input image, channels-first, spatial flat
    w1_ref : (Cout, K1*K1*Cin)    conv1 weight, transposed im2col layout
    b1_ref : (Cout, 1)
    w2_ref : (Cout, 9*Cout)       conv2 weight, transposed im2col layout
    b2_ref : (Cout, 1)
    m1_ref : (K1, H*W)            0/1 column-validity masks (per x tap offset)
    m2_ref : (3, L2)              0/1 column-validity masks for conv2
    sel_ref: (H*W, L2)            optional stride / valid-window selection
    o_ref  : (1, Cout, L2)        lane-dense NCHW-flat output slab
    scratch: margin-padded planes + transposed im2col slabs (VMEM only)
    """
    if use_sel:
        sel_ref, o_ref, xp_ref, col1_ref, yp_ref, col2_ref = rest
    else:
        o_ref, xp_ref, col1_ref, yp_ref, col2_ref = rest

    f32 = jnp.float32
    ML1, MR1 = _conv_margins(K1, pad, W)
    ML2, MR2 = Wo + 1, Wo + 1

    # ---- conv1 input -> margin-padded flat plane: zero only the halo -------
    if ML1:
        xp_ref[:, :ML1] = jnp.zeros((Cin, ML1), f32)
    if MR1:
        xp_ref[:, ML1 + HW:ML1 + HW + MR1] = jnp.zeros((Cin, MR1), f32)
    xp_ref[:, ML1:ML1 + HW] = x_ref[0]

    # ---- im2col slab #1 (transposed): (K1*K1*Cin, H*W), full-lane stores ----
    m1 = m1_ref[...]
    for dy in range(K1):
        for dx in range(K1):
            off = (dy - pad) * W + (dx - pad)
            v = xp_ref[:, ML1 + off:ML1 + off + HW]       # lane-offset read
            if dx != pad:                                 # row-wrap mask
                v = v * m1[dx:dx + 1, :]
            t = dy * K1 + dx
            col1_ref[t * Cin:(t + 1) * Cin, :] = v

    # ---- conv1: ONE MXU matmul (K = K1*K1*Cin) + bias + ReLU ---------------
    y1 = jnp.dot(w1_ref[...], col1_ref[...], preferred_element_type=f32)
    y1 = jnp.maximum(y1 + b1_ref[...], 0.0)               # (Cout, H*W)

    # ---- conv2 input plane: stride / window selection as a lane-dense matmul
    if ML2:
        yp_ref[:, :ML2] = jnp.zeros((Cout, ML2), f32)
    if MR2:
        yp_ref[:, ML2 + L2:ML2 + L2 + MR2] = jnp.zeros((Cout, MR2), f32)
    if use_sel:
        yp_ref[:, ML2:ML2 + L2] = jnp.dot(y1, sel_ref[...],
                                          preferred_element_type=f32)
    else:
        yp_ref[:, ML2:ML2 + HW] = y1
        if L2 > HW:
            yp_ref[:, ML2 + HW:ML2 + L2] = jnp.zeros((Cout, L2 - HW), f32)

    # ---- im2col slab #2 (transposed): (9*Cout, L2) --------------------------
    m2 = m2_ref[...]
    for dy in range(3):
        for dx in range(3):
            off = (dy - 1) * Wo + (dx - 1)
            v = yp_ref[:, ML2 + off:ML2 + off + L2]
            if dx != 1:
                v = v * m2[dx:dx + 1, :]
            t = dy * 3 + dx
            col2_ref[t * Cout:(t + 1) * Cout, :] = v

    # ---- conv2: ONE MXU matmul + bias + ReLU, lane-dense final store --------
    y2 = jnp.dot(w2_ref[...], col2_ref[...], preferred_element_type=f32)
    o_ref[0] = jnp.maximum(y2 + b2_ref[...], 0.0)


def init_double_conv_params(key, in_channels, out_channels, kernel_size):
    """Deterministic parameter init; weights stored HWIO."""
    k1, k2, k3, k4 = jax.random.split(key, 4)
    s1 = 1.0 / (in_channels * kernel_size * kernel_size) ** 0.5
    s2 = 1.0 / (out_channels * 3 * 3) ** 0.5
    w1 = jax.random.uniform(k1, (kernel_size, kernel_size, in_channels, out_channels),
                            jnp.float32, -s1, s1)
    b1 = jax.random.uniform(k2, (out_channels,), jnp.float32, -s1, s1)
    w2 = jax.random.uniform(k3, (3, 3, out_channels, out_channels),
                            jnp.float32, -s2, s2)
    b2 = jax.random.uniform(k4, (out_channels,), jnp.float32, -s2, s2)
    return dict(w1=w1, b1=b1, w2=w2, b2=b2)


@functools.partial(jax.jit, static_argnames=("stride", "padding"))
def double_conv_forward(x_nchw, params, *, stride, padding):
    """Matches DoubleConv.forward for NCHW input (PyTorch convention)."""
    N, Cin, H, W = x_nchw.shape
    w1, b1, w2, b2 = params["w1"], params["b1"], params["w2"], params["b2"]
    K1, Cout = w1.shape[0], w1.shape[3]
    pad = int(padding)
    if 2 * pad > K1 - 1:
        # TODO(synk): output grid larger than input grid (e.g. k=1, pad=1) is
        # not supported by the shift-based im2col; impossible for bool padding
        # with the usual k>=3.
        raise NotImplementedError("2*padding > kernel_size - 1 not supported")

    Ho = (H + 2 * pad - K1) // stride + 1
    Wo = (W + 2 * pad - K1) // stride + 1
    HW, HoWo = H * W, Ho * Wo
    L2 = ((HoWo + 127) // 128) * 128                 # lane-dense output width
    use_sel = not (stride == 1 and Ho == H and Wo == W)

    ML1, MR1 = _conv_margins(K1, pad, W)
    ML2, MR2 = Wo + 1, Wo + 1

    # Channels-first, spatial-flat input: free reshape, no transpose.
    x_flat = x_nchw.reshape(N, Cin, HW).astype(jnp.float32)

    # Weight / bias prep (tiny, once per call): transposed im2col layouts.
    w1t = jnp.transpose(w1.reshape(K1 * K1 * Cin, Cout))     # (Cout, K1*K1*Cin)
    b1r = b1.reshape(Cout, 1)
    w2t = jnp.transpose(w2.reshape(9 * Cout, Cout))          # (Cout, 9*Cout)
    b2r = b2.reshape(Cout, 1)

    # 0/1 column-validity masks (config constants; one row per x tap offset).
    cx1 = jnp.arange(HW, dtype=jnp.int32) % W
    m1 = jnp.stack([(cx1 + (dx - pad) >= 0) & (cx1 + (dx - pad) < W)
                    for dx in range(K1)]).astype(jnp.float32)           # (K1, HW)
    cx2 = jnp.arange(L2, dtype=jnp.int32) % Wo
    m2 = jnp.stack([(cx2 + (dx - 1) >= 0) & (cx2 + (dx - 1) < Wo)
                    for dx in range(3)]).astype(jnp.float32)            # (3, L2)

    operands = [x_flat, w1t, b1r, w2t, b2r, m1, m2]
    in_specs = [
        pl.BlockSpec((1, Cin, HW), lambda n: (n, 0, 0)),
        pl.BlockSpec((Cout, K1 * K1 * Cin), lambda n: (0, 0)),
        pl.BlockSpec((Cout, 1), lambda n: (0, 0)),
        pl.BlockSpec((Cout, 9 * Cout), lambda n: (0, 0)),
        pl.BlockSpec((Cout, 1), lambda n: (0, 0)),
        pl.BlockSpec((K1, HW), lambda n: (0, 0)),
        pl.BlockSpec((3, L2), lambda n: (0, 0)),
    ]
    if use_sel:
        # Strided / valid output positions picked by a one-hot matmul (no
        # strided VMEM reads); padded columns beyond HoWo stay zero.
        rows = ((jnp.arange(Ho) * stride)[:, None] * W
                + (jnp.arange(Wo) * stride)[None, :]).reshape(HoWo)
        sel = jax.nn.one_hot(rows, HW, dtype=jnp.float32).T             # (HW, HoWo)
        sel = jnp.pad(sel, ((0, 0), (0, L2 - HoWo)))
        operands.append(sel)
        in_specs.append(pl.BlockSpec((HW, L2), lambda n: (0, 0)))

    kern = functools.partial(fused_double_conv_kernel,
                             Cin=Cin, Cout=Cout, K1=K1, pad=pad,
                             W=W, Wo=Wo, HW=HW, L2=L2, use_sel=use_sel)

    out = pl.pallas_call(
        kern,
        out_shape=jax.ShapeDtypeStruct((N, Cout, L2), jnp.float32),
        grid=(N,),
        in_specs=in_specs,
        out_specs=pl.BlockSpec((1, Cout, L2), lambda n: (n, 0, 0)),
        scratch_shapes=[
            pltpu.VMEM((Cin, ML1 + HW + MR1), jnp.float32),   # conv1 plane (+halo)
            pltpu.VMEM((K1 * K1 * Cin, HW), jnp.float32),     # im2col slab #1
            pltpu.VMEM((Cout, ML2 + L2 + MR2), jnp.float32),  # conv2 plane (+halo)
            pltpu.VMEM((9 * Cout, L2), jnp.float32),          # im2col slab #2
        ],
        compiler_params=pltpu.CompilerParams(
            dimension_semantics=("parallel",),
        ),
    )(*operands)

    # (N, Cout, L2) -> valid lanes -> (N, Cout, Ho, Wo); slice+reshape only.
    return out[:, :, :HoWo].reshape(N, Cout, Ho, Wo)


def _reference(x_nchw, params, *, stride, padding):
    """Pure-JAX reference (lax.conv) for correctness checking."""
    x = jnp.transpose(x_nchw, (0, 2, 3, 1))
    dn = lax.conv_dimension_numbers(x.shape, params["w1"].shape,
                                    ("NHWC", "HWIO", "NHWC"))
    y = lax.conv_general_dilated(x, params["w1"], (stride, stride),
                                 [(padding, padding)] * 2, dimension_numbers=dn)
    y = jnp.maximum(y + params["b1"], 0.0)
    dn2 = lax.conv_dimension_numbers(y.shape, params["w2"].shape,
                                     ("NHWC", "HWIO", "NHWC"))
    y = lax.conv_general_dilated(y, params["w2"], (1, 1),
                                 [(1, 1)] * 2, dimension_numbers=dn2)
    y = jnp.maximum(y + params["b2"], 0.0)
    return jnp.transpose(y, (0, 3, 1, 2))


if __name__ == "__main__":
    # DoubleConv(in_channels=4, out_channels=8, kernel_size=3, stride=1, padding=True)
    in_channels, out_channels = 4, 8
    kernel_size, stride = 3, 1
    padding = True                       # PyTorch treats bool padding as int -> 1

    key = jax.random.PRNGKey(0)
    kx, kp = jax.random.split(key)
    x = jax.random.normal(kx, (2, in_channels, 16, 16), jnp.float32)   # NCHW
    params = init_double_conv_params(kp, in_channels, out_channels, kernel_size)

    out = double_conv_forward(x, params, stride=stride, padding=int(padding))
    out = jax.block_until_ready(out)

    ref = _reference(x, params, stride=stride, padding=int(padding))
    assert out.shape == ref.shape, (out.shape, ref.shape)
    assert jnp.allclose(out, ref, rtol=1e-4, atol=1e-4), "mismatch vs reference"

    print("KERNEL_OK")
</pallas_src>

<mosaic_0001>
module attributes {stable_mosaic.version = 11 : i64} {
  func.func @fused_double_conv_kernel(%arg0: i32, %arg1: memref<1x4x256xf32, #tpu.memory_space<vmem>>, %arg2: memref<8x36xf32, #tpu.memory_space<vmem>>, %arg3: memref<8x1xf32, #tpu.memory_space<vmem>>, %arg4: memref<8x72xf32, #tpu.memory_space<vmem>>, %arg5: memref<8x1xf32, #tpu.memory_space<vmem>>, %arg6: memref<3x256xf32, #tpu.memory_space<vmem>>, %arg7: memref<3x256xf32, #tpu.memory_space<vmem>>, %arg8: memref<1x8x256xf32, #tpu.memory_space<vmem>>, %arg9: memref<4x290xf32, #tpu.memory_space<vmem>>, %arg10: memref<36x256xf32, #tpu.memory_space<vmem>>, %arg11: memref<8x290xf32, #tpu.memory_space<vmem>>, %arg12: memref<72x256xf32, #tpu.memory_space<vmem>>) attributes {dimension_semantics = [#tpu.dimension_semantics<parallel>], iteration_bounds = array<i64: 2>, scalar_prefetch = 0 : i64, scratch_operands = 4 : i64, tpu.core_type = #tpu.core_type<tc>, window_params = [{transform_indices = @transform_0, window_bounds = array<i64: 1, 4, 256>}, {pipeline_mode = #tpu.pipeline_mode<synchronous>, transform_indices = @transform_1, window_bounds = array<i64: 8, 36>}, {pipeline_mode = #tpu.pipeline_mode<synchronous>, transform_indices = @transform_2, window_bounds = array<i64: 8, 1>}, {pipeline_mode = #tpu.pipeline_mode<synchronous>, transform_indices = @transform_3, window_bounds = array<i64: 8, 72>}, {pipeline_mode = #tpu.pipeline_mode<synchronous>, transform_indices = @transform_4, window_bounds = array<i64: 8, 1>}, {pipeline_mode = #tpu.pipeline_mode<synchronous>, transform_indices = @transform_5, window_bounds = array<i64: 3, 256>}, {pipeline_mode = #tpu.pipeline_mode<synchronous>, transform_indices = @transform_6, window_bounds = array<i64: 3, 256>}, {transform_indices = @transform_7, window_bounds = array<i64: 1, 8, 256>}]} {
    %cst = arith.constant 0.000000e+00 : f32
    %0 = vector.broadcast %cst : f32 to vector<4x17xf32>
    %c0 = arith.constant 0 : index
    %c0_0 = arith.constant 0 : index
    %1 = vector.load %arg9[%c0, %c0_0] : memref<4x290xf32, #tpu.memory_space<vmem>>, vector<4x17xf32>
    tpu.vector_store %arg9[%c0, %c0_0], %0 {strides = array<i32>} : memref<4x290xf32, #tpu.memory_space<vmem>>, vector<4x17xf32>,
    %cst_1 = arith.constant 0.000000e+00 : f32
    %2 = vector.broadcast %cst_1 : f32 to vector<4x17xf32>
    %c0_2 = arith.constant 0 : index
    %c273 = arith.constant 273 : index
    %3 = vector.load %arg9[%c0_2, %c273] : memref<4x290xf32, #tpu.memory_space<vmem>>, vector<4x17xf32>
    tpu.vector_store %arg9[%c0_2, %c273], %2 {strides = array<i32>} : memref<4x290xf32, #tpu.memory_space<vmem>>, vector<4x17xf32>,
    %c0_3 = arith.constant 0 : index
    %c0_4 = arith.constant 0 : index
    %c0_5 = arith.constant 0 : index
    %4 = vector.load %arg1[%c0_3, %c0_4, %c0_5] : memref<1x4x256xf32, #tpu.memory_space<vmem>>, vector<1x4x256xf32>
    %5 = vector.shape_cast %4 : vector<1x4x256xf32> to vector<4x256xf32>
    %c0_6 = arith.constant 0 : index
    %c17 = arith.constant 17 : index
    %6 = vector.load %arg9[%c0_6, %c17] : memref<4x290xf32, #tpu.memory_space<vmem>>, vector<4x256xf32>
    tpu.vector_store %arg9[%c0_6, %c17], %5 {strides = array<i32>} : memref<4x290xf32, #tpu.memory_space<vmem>>, vector<4x256xf32>,
    %c0_7 = arith.constant 0 : index
    %c0_8 = arith.constant 0 : index
    %7 = vector.load %arg6[%c0_7, %c0_8] : memref<3x256xf32, #tpu.memory_space<vmem>>, vector<3x256xf32>
    %c0_9 = arith.constant 0 : index
    %c0_10 = arith.constant 0 : index
    %8 = vector.load %arg9[%c0_9, %c0_10] : memref<4x290xf32, #tpu.memory_space<vmem>>, vector<4x256xf32>
    %9 = vector.extract_strided_slice %7 {offsets = [0, 0], sizes = [1, 256], strides = [1, 1]} : vector<3x256xf32> to vector<1x256xf32>
    %10 = vector.broadcast %9 : vector<1x256xf32> to vector<4x256xf32>
    %11 = arith.mulf %8, %10 : vector<4x256xf32>
    %c0_11 = arith.constant 0 : index
    %c0_12 = arith.constant 0 : index
    %12 = vector.load %arg10[%c0_11, %c0_12] : memref<36x256xf32, #tpu.memory_space<vmem>>, vector<4x256xf32>
    tpu.vector_store %arg10[%c0_11, %c0_12], %11 {strides = array<i32>} : memref<36x256xf32, #tpu.memory_space<vmem>>, vector<4x256xf32>,
    %c0_13 = arith.constant 0 : index
    %c1 = arith.constant 1 : index
    %13 = vector.load %arg9[%c0_13, %c1] : memref<4x290xf32, #tpu.memory_space<vmem>>, vector<4x256xf32>
    %c4 = arith.constant 4 : index
    %c0_14 = arith.constant 0 : index
    %14 = vector.load %arg10[%c4, %c0_14] : memref<36x256xf32, #tpu.memory_space<vmem>>, vector<4x256xf32>
    tpu.vector_store %arg10[%c4, %c0_14], %13 {strides = array<i32>} : memref<36x256xf32, #tpu.memory_space<vmem>>, vector<4x256xf32>,
    %c0_15 = arith.constant 0 : index
    %c2 = arith.constant 2 : index
    %15 = vector.load %arg9[%c0_15, %c2] : memref<4x290xf32, #tpu.memory_space<vmem>>, vector<4x256xf32>
    %16 = vector.extract_strided_slice %7 {offsets = [2, 0], sizes = [1, 256], strides = [1, 1]} : vector<3x256xf32> to vector<1x256xf32>
    %17 = vector.broadcast %16 : vector<1x256xf32> to vector<4x256xf32>
    %18 = arith.mulf %15, %17 : vector<4x256xf32>
    %c8 = arith.constant 8 : index
    %c0_16 = arith.constant 0 : index
    %19 = vector.load %arg10[%c8, %c0_16] : memref<36x256xf32, #tpu.memory_space<vmem>>, vector<4x256xf32>
    tpu.vector_store %arg10[%c8, %c0_16], %18 {strides = array<i32>} : memref<36x256xf32, #tpu.memory_space<vmem>>, vector<4x256xf32>,
    %c0_17 = arith.constant 0 : index
    %c16 = arith.constant 16 : index
    %20 = vector.load %arg9[%c0_17, %c16] : memref<4x290xf32, #tpu.memory_space<vmem>>, vector<4x256xf32>
    %21 = vector.extract_strided_slice %7 {offsets = [0, 0], sizes = [1, 256], strides = [1, 1]} : vector<3x256xf32> to vector<1x256xf32>
    %22 = vector.broadcast %21 : vector<1x256xf32> to vector<4x256xf32>
    %23 = arith.mulf %20, %22 : vector<4x256xf32>
    %c12 = arith.constant 12 : index
    %c0_18 = arith.constant 0 : index
    %24 = vector.load %arg10[%c12, %c0_18] : memref<36x256xf32, #tpu.memory_space<vmem>>, vector<4x256xf32>
    tpu.vector_store %arg10[%c12, %c0_18], %23 {strides = array<i32>} : memref<36x256xf32, #tpu.memory_space<vmem>>, vector<4x256xf32>,
    %c0_19 = arith.constant 0 : index
    %c17_20 = arith.constant 17 : index
    %25 = vector.load %arg9[%c0_19, %c17_20] : memref<4x290xf32, #tpu.memory_space<vmem>>, vector<4x256xf32>
    %c16_21 = arith.constant 16 : index
    %c0_22 = arith.constant 0 : index
    %26 = vector.load %arg10[%c16_21, %c0_22] : memref<36x256xf32, #tpu.memory_space<vmem>>, vector<4x256xf32>
    tpu.vector_store %arg10[%c16_21, %c0_22], %25 {strides = array<i32>} : memref<36x256xf32, #tpu.memory_space<vmem>>, vector<4x256xf32>,
    %c0_23 = arith.constant 0 : index
    %c18 = arith.constant 18 : index
    %27 = vector.load %arg9[%c0_23, %c18] : memref<4x290xf32, #tpu.memory_space<vmem>>, vector<4x256xf32>
    %28 = vector.extract_strided_slice %7 {offsets = [2, 0], sizes = [1, 256], strides = [1, 1]} : vector<3x256xf32> to vector<1x256xf32>
    %29 = vector.broadcast %28 : vector<1x256xf32> to vector<4x256xf32>
    %30 = arith.mulf %27, %29 : vector<4x256xf32>
    %c20 = arith.constant 20 : index
    %c0_24 = arith.constant 0 : index
    %31 = vector.load %arg10[%c20, %c0_24] : memref<36x256xf32, #tpu.memory_space<vmem>>, vector<4x256xf32>
    tpu.vector_store %arg10[%c20, %c0_24], %30 {strides = array<i32>} : memref<36x256xf32, #tpu.memory_space<vmem>>, vector<4x256xf32>,
    %c0_25 = arith.constant 0 : index
    %c32 = arith.constant 32 : index
    %32 = vector.load %arg9[%c0_25, %c32] : memref<4x290xf32, #tpu.memory_space<vmem>>, vector<4x256xf32>
    %33 = vector.extract_strided_slice %7 {offsets = [0, 0], sizes = [1, 256], strides = [1, 1]} : vector<3x256xf32> to vector<1x256xf32>
    %34 = vector.broadcast %33 : vector<1x256xf32> to vector<4x256xf32>
    %35 = arith.mulf %32, %34 : vector<4x256xf32>
    %c24 = arith.constant 24 : index
    %c0_26 = arith.constant 0 : index
    %36 = vector.load %arg10[%c24, %c0_26] : memref<36x256xf32, #tpu.memory_space<vmem>>, vector<4x256xf32>
    tpu.vector_store %arg10[%c24, %c0_26], %35 {strides = array<i32>} : memref<36x256xf32, #tpu.memory_space<vmem>>, vector<4x256xf32>,
    %c0_27 = arith.constant 0 : index
    %c33 = arith.constant 33 : index
    %37 = vector.load %arg9[%c0_27, %c33] : memref<4x290xf32, #tpu.memory_space<vmem>>, vector<4x256xf32>
    %c28 = arith.constant 28 : index
    %c0_28 = arith.constant 0 : index
    %38 = vector.load %arg10[%c28, %c0_28] : memref<36x256xf32, #tpu.memory_space<vmem>>, vector<4x256xf32>
    tpu.vector_store %arg10[%c28, %c0_28], %37 {strides = array<i32>} : memref<36x256xf32, #tpu.memory_space<vmem>>, vector<4x256xf32>,
    %c0_29 = arith.constant 0 : index
    %c34 = arith.constant 34 : index
    %39 = vector.load %arg9[%c0_29, %c34] : memref<4x290xf32, #tpu.memory_space<vmem>>, vector<4x256xf32>
    %40 = vector.extract_strided_slice %7 {offsets = [2, 0], sizes = [1, 256], strides = [1, 1]} : vector<3x256xf32> to vector<1x256xf32>
    %41 = vector.broadcast %40 : vector<1x256xf32> to vector<4x256xf32>
    %42 = arith.mulf %39, %41 : vector<4x256xf32>
    %c32_30 = arith.constant 32 : index
    %c0_31 = arith.constant 0 : index
    %43 = vector.load %arg10[%c32_30, %c0_31] : memref<36x256xf32, #tpu.memory_space<vmem>>, vector<4x256xf32>
    tpu.vector_store %arg10[%c32_30, %c0_31], %42 {strides = array<i32>} : memref<36x256xf32, #tpu.memory_space<vmem>>, vector<4x256xf32>,
    %c0_32 = arith.constant 0 : index
    %c0_33 = arith.constant 0 : index
    %44 = vector.load %arg2[%c0_32, %c0_33] : memref<8x36xf32, #tpu.memory_space<vmem>>, vector<8x36xf32>
    %c0_34 = arith.constant 0 : index
    %c0_35 = arith.constant 0 : index
    %45 = vector.load %arg10[%c0_34, %c0_35] : memref<36x256xf32, #tpu.memory_space<vmem>>, vector<36x256xf32>
    %cst_36 = arith.constant dense<0.000000e+00> : vector<8x256xf32>
    %46 = tpu.matmul %44, %45, %cst_36 {dimension_numbers = #tpu.dot_dimension_numbers<[1], [0], [0], [1], [0, 0, 1, 1], [], []>} : vector<8x36xf32>, vector<36x256xf32>, vector<8x256xf32> -> vector<8x256xf32>
    %c0_37 = arith.constant 0 : index
    %c0_38 = arith.constant 0 : index
    %47 = vector.load %arg3[%c0_37, %c0_38] : memref<8x1xf32, #tpu.memory_space<vmem>>, vector<8x1xf32>
    %48 = vector.broadcast %47 : vector<8x1xf32> to vector<8x256xf32>
    %49 = arith.addf %46, %48 : vector<8x256xf32>
    %cst_39 = arith.constant 0.000000e+00 : f32
    %50 = vector.broadcast %cst_39 : f32 to vector<8x256xf32>
    %51 = arith.maximumf %49, %50 : vector<8x256xf32>
    %cst_40 = arith.constant 0.000000e+00 : f32
    %52 = vector.broadcast %cst_40 : f32 to vector<8x17xf32>
    %c0_41 = arith.constant 0 : index
    %c0_42 = arith.constant 0 : index
    %53 = vector.load %arg11[%c0_41, %c0_42] : memref<8x290xf32, #tpu.memory_space<vmem>>, vector<8x17xf32>
    tpu.vector_store %arg11[%c0_41, %c0_42], %52 {strides = array<i32>} : memref<8x290xf32, #tpu.memory_space<vmem>>, vector<8x17xf32>,
    %cst_43 = arith.constant 0.000000e+00 : f32
    %54 = vector.broadcast %cst_43 : f32 to vector<8x17xf32>
    %c0_44 = arith.constant 0 : index
    %c273_45 = arith.constant 273 : index
    %55 = vector.load %arg11[%c0_44, %c273_45] : memref<8x290xf32, #tpu.memory_space<vmem>>, vector<8x17xf32>
    tpu.vector_store %arg11[%c0_44, %c273_45], %54 {strides = array<i32>} : memref<8x290xf32, #tpu.memory_space<vmem>>, vector<8x17xf32>,
    %c0_46 = arith.constant 0 : index
    %c17_47 = arith.constant 17 : index
    %56 = vector.load %arg11[%c0_46, %c17_47] : memref<8x290xf32, #tpu.memory_space<vmem>>, vector<8x256xf32>
    tpu.vector_store %arg11[%c0_46, %c17_47], %51 {strides = array<i32>} : memref<8x290xf32, #tpu.memory_space<vmem>>, vector<8x256xf32>,
    %c0_48 = arith.constant 0 : index
    %c0_49 = arith.constant 0 : index
    %57 = vector.load %arg7[%c0_48, %c0_49] : memref<3x256xf32, #tpu.memory_space<vmem>>, vector<3x256xf32>
    %c0_50 = arith.constant 0 : index
    %c0_51 = arith.constant 0 : index
    %58 = vector.load %arg11[%c0_50, %c0_51] : memref<8x290xf32, #tpu.memory_space<vmem>>, vector<8x256xf32>
    %59 = vector.extract_strided_slice %57 {offsets = [0, 0], sizes = [1, 256], strides = [1, 1]} : vector<3x256xf32> to vector<1x256xf32>
    %60 = vector.broadcast %59 : vector<1x256xf32> to vector<8x256xf32>
    %61 = arith.mulf %58, %60 : vector<8x256xf32>
    %c0_52 = arith.constant 0 : index
    %c0_53 = arith.constant 0 : index
    %62 = vector.load %arg12[%c0_52, %c0_53] : memref<72x256xf32, #tpu.memory_space<vmem>>, vector<8x256xf32>
    tpu.vector_store %arg12[%c0_52, %c0_53], %61 {strides = array<i32>} : memref<72x256xf32, #tpu.memory_space<vmem>>, vector<8x256xf32>,
    %c0_54 = arith.constant 0 : index
    %c1_55 = arith.constant 1 : index
    %63 = vector.load %arg11[%c0_54, %c1_55] : memref<8x290xf32, #tpu.memory_space<vmem>>, vector<8x256xf32>
    %c8_56 = arith.constant 8 : index
    %c0_57 = arith.constant 0 : index
    %64 = vector.load %arg12[%c8_56, %c0_57] : memref<72x256xf32, #tpu.memory_space<vmem>>, vector<8x256xf32>
    tpu.vector_store %arg12[%c8_56, %c0_57], %63 {strides = array<i32>} : memref<72x256xf32, #tpu.memory_space<vmem>>, vector<8x256xf32>,
    %c0_58 = arith.constant 0 : index
    %c2_59 = arith.constant 2 : index
    %65 = vector.load %arg11[%c0_58, %c2_59] : memref<8x290xf32, #tpu.memory_space<vmem>>, vector<8x256xf32>
    %66 = vector.extract_strided_slice %57 {offsets = [2, 0], sizes = [1, 256], strides = [1, 1]} : vector<3x256xf32> to vector<1x256xf32>
    %67 = vector.broadcast %66 : vector<1x256xf32> to vector<8x256xf32>
    %68 = arith.mulf %65, %67 : vector<8x256xf32>
    %c16_60 = arith.constant 16 : index
    %c0_61 = arith.constant 0 : index
    %69 = vector.load %arg12[%c16_60, %c0_61] : memref<72x256xf32, #tpu.memory_space<vmem>>, vector<8x256xf32>
    tpu.vector_store %arg12[%c16_60, %c0_61], %68 {strides = array<i32>} : memref<72x256xf32, #tpu.memory_space<vmem>>, vector<8x256xf32>,
    %c0_62 = arith.constant 0 : index
    %c16_63 = arith.constant 16 : index
    %70 = vector.load %arg11[%c0_62, %c16_63] : memref<8x290xf32, #tpu.memory_space<vmem>>, vector<8x256xf32>
    %71 = vector.extract_strided_slice %57 {offsets = [0, 0], sizes = [1, 256], strides = [1, 1]} : vector<3x256xf32> to vector<1x256xf32>
    %72 = vector.broadcast %71 : vector<1x256xf32> to vector<8x256xf32>
    %73 = arith.mulf %70, %72 : vector<8x256xf32>
    %c24_64 = arith.constant 24 : index
    %c0_65 = arith.constant 0 : index
    %74 = vector.load %arg12[%c24_64, %c0_65] : memref<72x256xf32, #tpu.memory_space<vmem>>, vector<8x256xf32>
    tpu.vector_store %arg12[%c24_64, %c0_65], %73 {strides = array<i32>} : memref<72x256xf32, #tpu.memory_space<vmem>>, vector<8x256xf32>,
    %c0_66 = arith.constant 0 : index
    %c17_67 = arith.constant 17 : index
    %75 = vector.load %arg11[%c0_66, %c17_67] : memref<8x290xf32, #tpu.memory_space<vmem>>, vector<8x256xf32>
    %c32_68 = arith.constant 32 : index
    %c0_69 = arith.constant 0 : index
    %76 = vector.load %arg12[%c32_68, %c0_69] : memref<72x256xf32, #tpu.memory_space<vmem>>, vector<8x256xf32>
    tpu.vector_store %arg12[%c32_68, %c0_69], %75 {strides = array<i32>} : memref<72x256xf32, #tpu.memory_space<vmem>>, vector<8x256xf32>,
    %c0_70 = arith.constant 0 : index
    %c18_71 = arith.constant 18 : index
    %77 = vector.load %arg11[%c0_70, %c18_71] : memref<8x290xf32, #tpu.memory_space<vmem>>, vector<8x256xf32>
    %78 = vector.extract_strided_slice %57 {offsets = [2, 0], sizes = [1, 256], strides = [1, 1]} : vector<3x256xf32> to vector<1x256xf32>
    %79 = vector.broadcast %78 : vector<1x256xf32> to vector<8x256xf32>
    %80 = arith.mulf %77, %79 : vector<8x256xf32>
    %c40 = arith.constant 40 : index
    %c0_72 = arith.constant 0 : index
    %81 = vector.load %arg12[%c40, %c0_72] : memref<72x256xf32, #tpu.memory_space<vmem>>, vector<8x256xf32>
    tpu.vector_store %arg12[%c40, %c0_72], %80 {strides = array<i32>} : memref<72x256xf32, #tpu.memory_space<vmem>>, vector<8x256xf32>,
    %c0_73 = arith.constant 0 : index
    %c32_74 = arith.constant 32 : index
    %82 = vector.load %arg11[%c0_73, %c32_74] : memref<8x290xf32, #tpu.memory_space<vmem>>, vector<8x256xf32>
    %83 = vector.extract_strided_slice %57 {offsets = [0, 0], sizes = [1, 256], strides = [1, 1]} : vector<3x256xf32> to vector<1x256xf32>
    %84 = vector.broadcast %83 : vector<1x256xf32> to vector<8x256xf32>
    %85 = arith.mulf %82, %84 : vector<8x256xf32>
    %c48 = arith.constant 48 : index
    %c0_75 = arith.constant 0 : index
    %86 = vector.load %arg12[%c48, %c0_75] : memref<72x256xf32, #tpu.memory_space<vmem>>, vector<8x256xf32>
    tpu.vector_store %arg12[%c48, %c0_75], %85 {strides = array<i32>} : memref<72x256xf32, #tpu.memory_space<vmem>>, vector<8x256xf32>,
    %c0_76 = arith.constant 0 : index
    %c33_77 = arith.constant 33 : index
    %87 = vector.load %arg11[%c0_76, %c33_77] : memref<8x290xf32, #tpu.memory_space<vmem>>, vector<8x256xf32>
    %c56 = arith.constant 56 : index
    %c0_78 = arith.constant 0 : index
    %88 = vector.load %arg12[%c56, %c0_78] : memref<72x256xf32, #tpu.memory_space<vmem>>, vector<8x256xf32>
    tpu.vector_store %arg12[%c56, %c0_78], %87 {strides = array<i32>} : memref<72x256xf32, #tpu.memory_space<vmem>>, vector<8x256xf32>,
    %c0_79 = arith.constant 0 : index
    %c34_80 = arith.constant 34 : index
    %89 = vector.load %arg11[%c0_79, %c34_80] : memref<8x290xf32, #tpu.memory_space<vmem>>, vector<8x256xf32>
    %90 = vector.extract_strided_slice %57 {offsets = [2, 0], sizes = [1, 256], strides = [1, 1]} : vector<3x256xf32> to vector<1x256xf32>
    %91 = vector.broadcast %90 : vector<1x256xf32> to vector<8x256xf32>
    %92 = arith.mulf %89, %91 : vector<8x256xf32>
    %c64 = arith.constant 64 : index
    %c0_81 = arith.constant 0 : index
    %93 = vector.load %arg12[%c64, %c0_81] : memref<72x256xf32, #tpu.memory_space<vmem>>, vector<8x256xf32>
    tpu.vector_store %arg12[%c64, %c0_81], %92 {strides = array<i32>} : memref<72x256xf32, #tpu.memory_space<vmem>>, vector<8x256xf32>,
    %c0_82 = arith.constant 0 : index
    %c0_83 = arith.constant 0 : index
    %94 = vector.load %arg4[%c0_82, %c0_83] : memref<8x72xf32, #tpu.memory_space<vmem>>, vector<8x72xf32>
    %c0_84 = arith.constant 0 : index
    %c0_85 = arith.constant 0 : index
    %95 = vector.load %arg12[%c0_84, %c0_85] : memref<72x256xf32, #tpu.memory_space<vmem>>, vector<72x256xf32>
    %cst_86 = arith.constant dense<0.000000e+00> : vector<8x256xf32>
    %96 = tpu.matmul %94, %95, %cst_86 {dimension_numbers = #tpu.dot_dimension_numbers<[1], [0], [0], [1], [0, 0, 1, 1], [], []>} : vector<8x72xf32>, vector<72x256xf32>, vector<8x256xf32> -> vector<8x256xf32>
    %c0_87 = arith.constant 0 : index
    %c0_88 = arith.constant 0 : index
    %97 = vector.load %arg5[%c0_87, %c0_88] : memref<8x1xf32, #tpu.memory_space<vmem>>, vector<8x1xf32>
    %98 = vector.broadcast %97 : vector<8x1xf32> to vector<8x256xf32>
    %99 = arith.addf %96, %98 : vector<8x256xf32>
    %cst_89 = arith.constant 0.000000e+00 : f32
    %100 = vector.broadcast %cst_89 : f32 to vector<8x256xf32>
    %101 = arith.maximumf %99, %100 : vector<8x256xf32>
    %c0_90 = arith.constant 0 : index
    %c0_91 = arith.constant 0 : index
    %c0_92 = arith.constant 0 : index
    %102 = vector.load %arg8[%c0_90, %c0_91, %c0_92] : memref<1x8x256xf32, #tpu.memory_space<vmem>>, vector<1x8x256xf32>
    %103 = vector.shape_cast %102 : vector<1x8x256xf32> to vector<8x256xf32>
    %104 = vector.shape_cast %101 : vector<8x256xf32> to vector<1x8x256xf32>
    tpu.vector_store %arg8[%c0_90, %c0_91, %c0_92], %104 {strides = array<i32>} : memref<1x8x256xf32, #tpu.memory_space<vmem>>, vector<1x8x256xf32>,
    return
  }
  func.func @transform_0(%arg0: i32) -> (i32, i32, i32) {
    %c0_i32 = arith.constant 0 : i32
    %c0_i32_0 = arith.constant 0 : i32
    %c0_i32_1 = arith.constant 0 : i32
    return %arg0, %c0_i32, %c0_i32_0 : i32, i32, i32
  }
  func.func @transform_1(%arg0: i32) -> (i32, i32) {
    %c0_i32 = arith.constant 0 : i32
    %c0_i32_0 = arith.constant 0 : i32
    %c0_i32_1 = arith.constant 0 : i32
    return %c0_i32, %c0_i32_0 : i32, i32
  }
  func.func @transform_2(%arg0: i32) -> (i32, i32) {
    %c0_i32 = arith.constant 0 : i32
    %c0_i32_0 = arith.constant 0 : i32
    %c0_i32_1 = arith.constant 0 : i32
    return %c0_i32, %c0_i32_0 : i32, i32
  }
  func.func @transform_3(%arg0: i32) -> (i32, i32) {
    %c0_i32 = arith.constant 0 : i32
    %c0_i32_0 = arith.constant 0 : i32
    %c0_i32_1 = arith.constant 0 : i32
    return %c0_i32, %c0_i32_0 : i32, i32
  }
  func.func @transform_4(%arg0: i32) -> (i32, i32) {
    %c0_i32 = arith.constant 0 : i32
    %c0_i32_0 = arith.constant 0 : i32
    %c0_i32_1 = arith.constant 0 : i32
    return %c0_i32, %c0_i32_0 : i32, i32
  }
  func.func @transform_5(%arg0: i32) -> (i32, i32) {
    %c0_i32 = arith.constant 0 : i32
    %c0_i32_0 = arith.constant 0 : i32
    %c0_i32_1 = arith.constant 0 : i32
    return %c0_i32, %c0_i32_0 : i32, i32
  }
  func.func @transform_6(%arg0: i32) -> (i32, i32) {
    %c0_i32 = arith.constant 0 : i32
    %c0_i32_0 = arith.constant 0 : i32
    %c0_i32_1 = arith.constant 0 : i32
    return %c0_i32, %c0_i32_0 : i32, i32
  }
  func.func @transform_7(%arg0: i32) -> (i32, i32, i32) {
    %c0_i32 = arith.constant 0 : i32
    %c0_i32_0 = arith.constant 0 : i32
    %c0_i32_1 = arith.constant 0 : i32
    return %arg0, %c0_i32, %c0_i32_0 : i32, i32, i32
  }
}

</mosaic_0001>

<llo_original>
// kernel: double_conv_forward.1
$region0: #{double_conv_forward.1}
  #allocation0 [shape = 'u32[]', space=smem, size = 0x4, offset = 0x4, fixed_abs, tag = 'smem constant byte address 0x4 - core index']
  #allocation1 [shape = 'u32[144,128]{1,0:T(1,128)}', space=vmem, size = 0x12000, scoped, tag = 'internal scratch']
  #allocation2 [shape = 'f32[4,290]{1,0:T(4,128)}', space=vmem, size = 0x1800, scoped, tag = 'scratch operand']
  #allocation3 [shape = 'f32[36,256]{1,0:T(8,128)}', space=vmem, size = 0xa000, scoped, tag = 'scratch operand']
  #allocation4 [shape = 'f32[8,290]{1,0:T(8,128)}', space=vmem, size = 0x3000, scoped, tag = 'scratch operand']
  #allocation5 [shape = 'f32[72,256]{1,0:T(8,128)}', space=vmem, size = 0x12000, scoped, tag = 'scratch operand']
  %s0 = inlined_call_operand.vmem [shape: f32[2,4,256], index: 0, kind: input, shape index: {}]
  %s1 = inlined_call_operand.vmem [shape: f32[8,36], index: 1, kind: input, shape index: {}]
  %s2 = inlined_call_operand.vmem [shape: f32[8,1], index: 2, kind: input, shape index: {}]
  %s3 = inlined_call_operand.vmem [shape: f32[8,72], index: 3, kind: input, shape index: {}]
  %s4 = inlined_call_operand.vmem [shape: f32[8,1], index: 4, kind: input, shape index: {}]
  %s5 = inlined_call_operand.vmem [shape: f32[3,256], index: 5, kind: input, shape index: {}, may-alias: {5,6}]
  %s6 = inlined_call_operand.vmem [shape: f32[3,256], index: 6, kind: input, shape index: {}, may-alias: {5,6}]
  %s7 = inlined_call_operand.vmem [shape: f32[2,8,256], index: 7, kind: output, shape index: {}]
  %s8 = sld [smem:[#allocation0]]
  $region61: #{double_conv_forward.1} parent=0
    _
  %s10 = ssub.s32 1, %s8
  %s11 = scalar_select 0, %s10, %s8
  loop: start=0, step=1, limit=4
  $region2: #{double_conv_forward.1} parent=0 // loop_pre_header
    _
  $region3: #{double_conv_forward.1} parent=0 // loop_header
    %s13 = sphi 0, %s17
    %p14 = scmp.ge.s32.totalorder %s13, 4
    %s23 = sphi 0, %s25
    %s26 = sphi 0, %s23
    %s27 = sphi 0, %s26
    %s43 = sphi 0, %s27
    %s47 = sphi 0, %s47
    %s49 = sphi 0, %s47
    %s50 = sphi 0, %s49
    %s64 = sphi 0, %s50
    %s68 = sphi 0, %s68
    %s70 = sphi 0, %s68
    %s71 = sphi 0, %s70
    %s85 = sphi 0, %s71
    %s89 = sphi 0, %s89
    %s91 = sphi 0, %s89
    %s92 = sphi 0, %s91
    %s106 = sphi 0, %s92
    %s110 = sphi 0, %s110
    %s112 = sphi 0, %s110
    %s113 = sphi 0, %s112
    %s127 = sphi 0, %s113
    %s131 = sphi 0, %s131
    %s133 = sphi 0, %s131
    %s134 = sphi 0, %s133
    %s148 = sphi 0, %s134
    %s152 = sphi 0, %s152
    %s154 = sphi 0, %s152
    %s155 = sphi 0, %s154
    %s169 = sphi 0, %s155
    %s175 = sphi 0, %s177
    %s178 = sphi 0, %s175
    %s179 = sphi 0, %s178
    %s195 = sphi 0, %s179
  $region4: #{double_conv_forward.1} parent=0 // loop_header_branch
    %16 = sbr.rel (%p14) target = $region8
  $region5: #{double_conv_forward.1} parent=0 // loop_body
    %s18 = ssub.s32 %s13, 1
    %s19 = ssub.s32 %s13, 2
    %s20 = sadd.s32 %s13, 1
    %s21 = ssub.s32 %s13, %s20
    %p22 = scmp.eq.s32.totalorder %s21, 0
    %s24 = sadd.s32 %s23, 1
    %s25 = scalar_select %p22, %s23, %s24
    %p28 = pneg %p22
    %p29 = scmp.eq.s32.totalorder %s13, 1
    %p30 = por %p28, %p29
    %p31 = scmp.ne.s32.totalorder %s23, %s26
    %p32 = scmp.eq.s32.totalorder %s13, 0
    %p33 = por %p31, %p32
    %p34 = scmp.ne.s32.totalorder %s23, %s26
    %p35 = scmp.eq.s32.totalorder %s18, 1
    %p36 = por %p34, %p35
    %p37 = scmp.ne.s32.totalorder %s26, %s27
    %p38 = scmp.eq.s32.totalorder %s18, 0
    %p39 = por %p37, %p38
    %p40 = scmp.ne.s32.totalorder %s26, %s27
    %p41 = scmp.eq.s32.totalorder %s19, 1
    %p42 = por %p40, %p41
    %p44 = scmp.ne.s32.totalorder %s27, %s43
    %p45 = scmp.eq.s32.totalorder %s19, 0
    %p46 = por %p44, %p45
    %s48 = sadd.s32 %s47, 1
    %p51 = scmp.eq.s32.totalorder %s13, 1
    %p52 = scmp.ne.s32.totalorder %s47, %s49
    %p53 = scmp.eq.s32.totalorder %s13, 0
    %p54 = por %p52, %p53
    %p55 = scmp.ne.s32.totalorder %s47, %s49
    %p56 = scmp.eq.s32.totalorder %s18, 1
    %p57 = por %p55, %p56
    %p58 = scmp.ne.s32.totalorder %s49, %s50
    %p59 = scmp.eq.s32.totalorder %s18, 0
    %p60 = por %p58, %p59
    %p61 = scmp.ne.s32.totalorder %s49, %s50
    %p62 = scmp.eq.s32.totalorder %s19, 1
    %p63 = por %p61, %p62
    %p65 = scmp.ne.s32.totalorder %s50, %s64
    %p66 = scmp.eq.s32.totalorder %s19, 0
    %p67 = por %p65, %p66
    %s69 = sadd.s32 %s68, 1
    %p72 = scmp.eq.s32.totalorder %s13, 1
    %p73 = scmp.ne.s32.totalorder %s68, %s70
    %p74 = scmp.eq.s32.totalorder %s13, 0
    %p75 = por %p73, %p74
    %p76 = scmp.ne.s32.totalorder %s68, %s70
    %p77 = scmp.eq.s32.totalorder %s18, 1
    %p78 = por %p76, %p77
    %p79 = scmp.ne.s32.totalorder %s70, %s71
    %p80 = scmp.eq.s32.totalorder %s18, 0
    %p81 = por %p79, %p80
    %p82 = scmp.ne.s32.totalorder %s70, %s71
    %p83 = scmp.eq.s32.totalorder %s19, 1
    %p84 = por %p82, %p83
    %p86 = scmp.ne.s32.totalorder %s71, %s85
    %p87 = scmp.eq.s32.totalorder %s19, 0
    %p88 = por %p86, %p87
    %s90 = sadd.s32 %s89, 1
    %p93 = scmp.eq.s32.totalorder %s13, 1
    %p94 = scmp.ne.s32.totalorder %s89, %s91
    %p95 = scmp.eq.s32.totalorder %s13, 0
    %p96 = por %p94, %p95
    %p97 = scmp.ne.s32.totalorder %s89, %s91
    %p98 = scmp.eq.s32.totalorder %s18, 1
    %p99 = por %p97, %p98
    %p100 = scmp.ne.s32.totalorder %s91, %s92
    %p101 = scmp.eq.s32.totalorder %s18, 0
    %p102 = por %p100, %p101
    %p103 = scmp.ne.s32.totalorder %s91, %s92
    %p104 = scmp.eq.s32.totalorder %s19, 1
    %p105 = por %p103, %p104
    %p107 = scmp.ne.s32.totalorder %s92, %s106
    %p108 = scmp.eq.s32.totalorder %s19, 0
    %p109 = por %p107, %p108
    %s111 = sadd.s32 %s110, 1
    %p114 = scmp.eq.s32.totalorder %s13, 1
    %p115 = scmp.ne.s32.totalorder %s110, %s112
    %p116 = scmp.eq.s32.totalorder %s13, 0
    %p117 = por %p115, %p116
    %p118 = scmp.ne.s32.totalorder %s110, %s112
    %p119 = scmp.eq.s32.totalorder %s18, 1
    %p120 = por %p118, %p119
    %p121 = scmp.ne.s32.totalorder %s112, %s113
    %p122 = scmp.eq.s32.totalorder %s18, 0
    %p123 = por %p121, %p122
    %p124 = scmp.ne.s32.totalorder %s112, %s113
    %p125 = scmp.eq.s32.totalorder %s19, 1
    %p126 = por %p124, %p125
    %p128 = scmp.ne.s32.totalorder %s113, %s127
    %p129 = scmp.eq.s32.totalorder %s19, 0
    %p130 = por %p128, %p129
    %s132 = sadd.s32 %s131, 1
    %p135 = scmp.eq.s32.totalorder %s13, 1
    %p136 = scmp.ne.s32.totalorder %s131, %s133
    %p137 = scmp.eq.s32.totalorder %s13, 0
    %p138 = por %p136, %p137
    %p139 = scmp.ne.s32.totalorder %s131, %s133
    %p140 = scmp.eq.s32.totalorder %s18, 1
    %p141 = por %p139, %p140
    %p142 = scmp.ne.s32.totalorder %s133, %s134
    %p143 = scmp.eq.s32.totalorder %s18, 0
    %p144 = por %p142, %p143
    %p145 = scmp.ne.s32.totalorder %s133, %s134
    %p146 = scmp.eq.s32.totalorder %s19, 1
    %p147 = por %p145, %p146
    %p149 = scmp.ne.s32.totalorder %s134, %s148
    %p150 = scmp.eq.s32.totalorder %s19, 0
    %p151 = por %p149, %p150
    %s153 = sadd.s32 %s152, 1
    %p156 = scmp.eq.s32.totalorder %s13, 1
    %p157 = scmp.ne.s32.totalorder %s152, %s154
    %p158 = scmp.eq.s32.totalorder %s13, 0
    %p159 = por %p157, %p158
    %p160 = scmp.ne.s32.totalorder %s152, %s154
    %p161 = scmp.eq.s32.totalorder %s18, 1
    %p162 = por %p160, %p161
    %p163 = scmp.ne.s32.totalorder %s154, %s155
    %p164 = scmp.eq.s32.totalorder %s18, 0
    %p165 = por %p163, %p164
    %p166 = scmp.ne.s32.totalorder %s154, %s155
    %p167 = scmp.eq.s32.totalorder %s19, 1
    %p168 = por %p166, %p167
    %p170 = scmp.ne.s32.totalorder %s155, %s169
    %p171 = scmp.eq.s32.totalorder %s19, 0
    %p172 = por %p170, %p171
    %s173 = ssub.s32 %s13, %s20
    %p174 = scmp.eq.s32.totalorder %s173, 0
    %s176 = sadd.s32 %s175, 1
    %s177 = scalar_select %p174, %s175, %s176
    %p180 = pneg %p174
    %p181 = scmp.eq.s32.totalorder %s13, 1
    %p182 = por %p180, %p181
    %p183 = scmp.ne.s32.totalorder %s175, %s178
    %p184 = scmp.eq.s32.totalorder %s13, 0
    %p185 = por %p183, %p184
    %p186 = scmp.ne.s32.totalorder %s175, %s178
    %p187 = scmp.eq.s32.totalorder %s18, 1
    %p188 = por %p186, %p187
    %p189 = scmp.ne.s32.totalorder %s178, %s179
    %p190 = scmp.eq.s32.totalorder %s18, 0
    %p191 = por %p189, %p190
    %p192 = scmp.ne.s32.totalorder %s178, %s179
    %p193 = scmp.eq.s32.totalorder %s19, 1
    %p194 = por %p192, %p193
    %p196 = scmp.ne.s32.totalorder %s179, %s195
    %p197 = scmp.eq.s32.totalorder %s19, 0
    %p198 = por %p196, %p197
    %p199 = scmp.le.s32.totalorder 1, %s13
    %p200 = scmp.lt.s32.totalorder %s13, 3
    %p201 = pnand %p199, %p200
    %p202 = pneg %p201
    // Predicated region
    $region9: #{double_conv_forward.1} parent=5 // pred_check
      _
    $region10: #{double_conv_forward.1} parent=5 // pred_check_branch
      %204 = sbr.rel (%p201) target = $region12
    $region11: #{double_conv_forward.1} parent=5 // pred_region
      %s205 = ssub.s32 %s13, 1
      // Predicated region
      $region13: #{double_conv_forward.1} parent=11 // pred_check
        %p206 = pneg %p60
      $region14: #{double_conv_forward.1} parent=11 // pred_check_branch
        %208 = sbr.rel (%p206) target = $region16
      $region15: #{double_conv_forward.1} parent=11 // pred_region
        _
      $region16: #{double_conv_forward.1} parent=11 // pred_fallthru
        _
      // Predicated region
      $region17: #{double_conv_forward.1} parent=11 // pred_check
        %p209 = pneg %p81
      $region18: #{double_conv_forward.1} parent=11 // pred_check_branch
        %211 = sbr.rel (%p209) target = $region20
      $region19: #{double_conv_forward.1} parent=11 // pred_region
        _
      $region20: #{double_conv_forward.1} parent=11 // pred_fallthru
        _
      // Predicated region
      $region21: #{double_conv_forward.1} parent=11 // pred_check
        %p212 = pneg %p102
      $region22: #{double_conv_forward.1} parent=11 // pred_check_branch
        %214 = sbr.rel (%p212) target = $region24
      $region23: #{double_conv_forward.1} parent=11 // pred_region
        _
      $region24: #{double_conv_forward.1} parent=11 // pred_fallthru
        _
      // Predicated region
      $region25: #{double_conv_forward.1} parent=11 // pred_check
        %p215 = pneg %p123
      $region26: #{double_conv_forward.1} parent=11 // pred_check_branch
        %217 = sbr.rel (%p215) target = $region28
      $region27: #{double_conv_forward.1} parent=11 // pred_region
        _
      $region28: #{double_conv_forward.1} parent=11 // pred_fallthru
        _
      // Predicated region
      $region29: #{double_conv_forward.1} parent=11 // pred_check
        %p218 = pneg %p144
      $region30: #{double_conv_forward.1} parent=11 // pred_check_branch
        %220 = sbr.rel (%p218) target = $region32
      $region31: #{double_conv_forward.1} parent=11 // pred_region
        _
      $region32: #{double_conv_forward.1} parent=11 // pred_fallthru
        _
      // Predicated region
      $region33: #{double_conv_forward.1} parent=11 // pred_check
        %p221 = pneg %p165
      $region34: #{double_conv_forward.1} parent=11 // pred_check_branch
        %223 = sbr.rel (%p221) target = $region36
      $region35: #{double_conv_forward.1} parent=11 // pred_region
        _
      $region36: #{double_conv_forward.1} parent=11 // pred_fallthru
        _
    $region12: #{double_conv_forward.1} parent=5 // pred_fallthru
      _
    %p224 = scmp.lt.s32.totalorder %s13, 2
    // Predicated region
    $region37: #{double_conv_forward.1} parent=5 // pred_check
      %p225 = pneg %p224
    $region38: #{double_conv_forward.1} parent=5 // pred_check_branch
      %227 = sbr.rel (%p225) target = $region40
    $region39: #{double_conv_forward.1} parent=5 // pred_region
      // Predicated region
      $region41: #{double_conv_forward.1} parent=39 // pred_check
        %p228 = pneg %p33
      $region42: #{double_conv_forward.1} parent=39 // pred_check_branch
        %230 = sbr.rel (%p228) target = $region44
      $region43: #{double_conv_forward.1} parent=39 // pred_region
        %p231 = scmp.lt.s32.totalorder %s13, 1
        %s232 = scalar_select %p231, %s13, 1
        %s233 = smul.addr %s232, 2
        %s234 = smul.addr %s233, 4
        %s235 = scalar_lea.vmem %s0, %s234
      $region44: #{double_conv_forward.1} parent=39 // pred_fallthru
        _
    $region40: #{double_conv_forward.1} parent=5 // pred_fallthru
      _
    %p236 = scmp.le.s32.totalorder 1, %s13
    %p237 = scmp.lt.s32.totalorder %s13, 3
    %p238 = pnand %p236, %p237
    %p239 = pneg %p238
    // Predicated region
    $region45: #{double_conv_forward.1} parent=5 // pred_check
      _
    $region46: #{double_conv_forward.1} parent=5 // pred_check_branch
      %241 = sbr.rel (%p238) target = $region48
    $region47: #{double_conv_forward.1} parent=5 // pred_region
      %s242 = ssub.s32 %s13, 1
      %p243 = scmp.lt.s32.totalorder %s18, 1
      %s244 = scalar_select %p243, %s18, 1
      %s245 = smul.addr %s244, 2
      %s246 = smul.addr %s245, 4
      %s247 = scalar_lea.vmem %s0, %s246
      %p248 = pneg %p39
      %p249 = pneg %p36
      %p250 = pneg %p60
      %p251 = pneg %p57
      %p252 = pneg %p81
      %p253 = pneg %p78
      %p254 = pneg %p102
      %p255 = pneg %p99
      %p256 = pneg %p123
      %p257 = pneg %p120
      %p258 = pneg %p144
      %p259 = pneg %p141
      %p260 = pneg %p165
      %p261 = pneg %p162
      %p262 = pneg %p191
      %p263 = pneg %p188
      %p264 = scmp.lt.s32.totalorder %s18, 1
      %s265 = scalar_select %p264, %s18, 1
      %s266 = smul.addr %s265, 2
      %s267 = smul.addr %s266, 8
      %s268 = scalar_lea.vmem %s7, %s267
      %p269 = scmp.lt.s32.totalorder %s18, 1
      %s270 = scalar_select %p269, %s18, 1
      %s271 = smul.addr %s270, 2
      %s272 = smul.addr %s271, 4
      %s273 = scalar_lea.vmem %s0, %s272
      %p274 = scmp.lt.s32.totalorder %s18, 1
      %s275 = scalar_select %p274, %s18, 1
      %s276 = smul.addr %s275, 2
      %s277 = smul.addr %s276, 8
      %s278 = scalar_lea.vmem %s7, %s277
      %vm279 = vcmask 134144
      %280 = vst.msk [vmem:[#allocation2] sm:$0xf] %vm279, 0.0
      %vm281 = vcmask 273544
      %282 = vst.msk [vmem:[#allocation2 + $0x8] sm:$0xf] %vm281, 0.0
      %v283 = vld [vmem:[%s273] sm:$0xff]
      %285 = vrot.lane.b32.xlu0 %v283, 17
      %v286 = vpop.permute.xlu0 %285
      %v287 = vrot.slane %v286, 4
      %vm288 = vcmask 138240
      %v289 = vsel %vm288, %v287, %v286
      %vm292 = vcmask 1043592
      %vm293 = vcmask 1047556
      %vm294 = vmor %vm293, %vm292
      %295 = vst.msk [vmem:[#allocation2] sm:$0xff] %vm294, %v289
      %296 = vst.msk [vmem:[#allocation2 + $0x8] sm:$0xf] %vm279, %v287
      %v297 = vld [vmem:[%s5] sm:$0x77]
      %v298 = vld [vmem:[#allocation2] sm:$0xff]
      %v300 = vlaneseq
      %v301 = vshrl.u32 %v300, 7
      %v302 = vsub.s32 0, %v301
      %v303 = vrot.slane %v297, %v302
      %v304 = vlaneseq
      %v305 = vshrl.u32 %v304, 7
      %v306 = vsub.s32 4, %v305
      %v307 = vrot.slane %v297, %v306
      %v310 = vlaneseq
      %v311 = vshrl.u32 %v310, 7
      %v312 = vsub.s32 0, %v311
      %v313 = vrot.slane %v303, %v312
      %v314 = vlaneseq
      %v315 = vshrl.u32 %v314, 7
      %v316 = vsub.s32 0, %v315
      %v317 = vrot.slane %v307, %v316
      %v320 = vcombine.low %v313, %v317
      %v322 = vmul.f32 %v298, %v320
      %v324 = vcombine.high %v322, %v322
      %326 = vst [vmem:[#allocation3] sm:$0xf] %v322
      %327 = vst [vmem:[#allocation3 + $0x8] sm:$0xf] %v324
      %v328 = vld [vmem:[#allocation2] sm:$0xff]
      %v329 = vld [vmem:[#allocation2 + $0x8] sm:$0xf]
      %v332 = vcombine.low %v328, %v328
      %v333 = vcombine.low %v329, %v329
      %334 = vrot.lane.b32.xlu0 %v332, 127
      %v335 = vpop.permute.xlu0 %334
      %336 = vrot.lane.b32.xlu0 %v328, 127
      %v337 = vpop.permute.xlu0 %336
      %338 = vrot.lane.b32.xlu0 %v333, 127
      %v339 = vpop.permute.xlu0 %338
      %vm340 = vcmask 1039360
      %v341 = vsel %vm340, %v335, %v337
      %v342 = vsel %vm340, %v337, %v339
      %345 = vst [vmem:[#allocation3] sm:$0xf0] %v341
      %346 = vst [vmem:[#allocation3 + $0x8] sm:$0xf0] %v342
      %v347 = vld [vmem:[#allocation2] sm:$0xff]
      %v348 = vld [vmem:[#allocation2 + $0x8] sm:$0xf]
      %v349 = vlaneseq
      %v350 = vshrl.u32 %v349, 7
      %v351 = vsub.s32 2, %v350
      %v352 = vrot.slane %v297, %v351
      %v353 = vlaneseq
      %v354 = vshrl.u32 %v353, 7
      %v355 = vsub.s32 6, %v354
      %v356 = vrot.slane %v297, %v355
      %v359 = vlaneseq
      %v360 = vshrl.u32 %v359, 7
      %v361 = vsub.s32 2, %v360
      %v362 = vrot.slane %v352, %v361
      %v363 = vlaneseq
      %v364 = vshrl.u32 %v363, 7
      %v365 = vsub.s32 2, %v364
      %v366 = vrot.slane %v356, %v365
      %v369 = vcombine.low %v362, %v366
      %370 = vrot.lane.b32.xlu0 %v369, 2
      %v371 = vpop.permute.xlu0 %370
      %v372 = vrot.slane %v371, 4
      %vm373 = vcmask 15360
      %v374 = vsel %vm373, %v372, %v371
      %v377 = vmul.f32 %v347, %v374
      %v378 = vmul.f32 %v348, %v372
      %v381 = vcombine.high %v377, %v377
      %382 = vrot.lane.b32.xlu0 %v377, 126
      %v383 = vpop.permute.xlu0 %382
      %384 = vrot.lane.b32.xlu0 %v381, 126
      %v385 = vpop.permute.xlu0 %384
      %386 = vrot.lane.b32.xlu0 %v378, 126
      %v387 = vpop.permute.xlu0 %386
      %vm388 = vcmask 1031168
      %v389 = vsel %vm388, %v383, %v385
      %v390 = vsel %vm388, %v385, %v387
      %393 = vst [vmem:[#allocation3 + $0x10] sm:$0xf] %v389
      %394 = vst [vmem:[#allocation3 + $0x18] sm:$0xf] %v390
      %v395 = vld [vmem:[#allocation2] sm:$0xff]
      %v396 = vld [vmem:[#allocation2 + $0x8] sm:$0xf]
      %397 = vrot.lane.b32.xlu0 %v320, 16
      %v398 = vpop.permute.xlu0 %397
      %v399 = vrot.slane %v398, 4
      %vm400 = vcmask 130048
      %v401 = vsel %vm400, %v399, %v398
      %v404 = vmul.f32 %v395, %v401
      %v405 = vmul.f32 %v396, %v399
      %v408 = vcombine.low %v404, %v404
      %v409 = vcombine.low %v405, %v405
      %410 = vrot.lane.b32.xlu0 %v408, 112
      %v411 = vpop.permute.xlu0 %410
      %412 = vrot.lane.b32.xlu0 %v404, 112
      %v413 = vpop.permute.xlu0 %412
      %414 = vrot.lane.b32.xlu0 %v409, 112
      %v415 = vpop.permute.xlu0 %414
      %vm416 = vcmask 916480
      %v417 = vsel %vm416, %v411, %v413
      %v418 = vsel %vm416, %v413, %v415
      %421 = vst [vmem:[#allocation3 + $0x10] sm:$0xf0] %v417
      %422 = vst [vmem:[#allocation3 + $0x18] sm:$0xf0] %v418
      %v423 = vld [vmem:[#allocation2] sm:$0xff]
      %v424 = vld [vmem:[#allocation2 + $0x8] sm:$0xf]
      %v427 = vcombine.high %v423, %v423
      %428 = vrot.lane.b32.xlu0 %v423, 111
      %v429 = vpop.permute.xlu0 %428
      %430 = vrot.lane.b32.xlu0 %v427, 111
      %v431 = vpop.permute.xlu0 %430
      %432 = vrot.lane.b32.xlu0 %v424, 111
      %v433 = vpop.permute.xlu0 %432
      %vm434 = vcmask 908288
      %v435 = vsel %vm434, %v429, %v431
      %v436 = vsel %vm434, %v431, %v433
      %439 = vst [vmem:[#allocation3 + $0x20] sm:$0xf] %v435
      %440 = vst [vmem:[#allocation3 + $0x28] sm:$0xf] %v436
      %v441 = vld [vmem:[#allocation2] sm:$0xff]
      %v442 = vld [vmem:[#allocation2 + $0x8] sm:$0xf]
      %443 = vrot.lane.b32.xlu0 %v369, 18
      %v444 = vpop.permute.xlu0 %443
      %v445 = vrot.slane %v444, 4
      %vm446 = vcmask 146432
      %v447 = vsel %vm446, %v445, %v444
      %v450 = vmul.f32 %v441, %v447
      %v451 = vmul.f32 %v442, %v445
      %v454 = vcombine.low %v450, %v450
      %v455 = vcombine.low %v451, %v451
      %456 = vrot.lane.b32.xlu0 %v454, 110
      %v457 = vpop.permute.xlu0 %456
      %458 = vrot.lane.b32.xlu0 %v450, 110
      %v459 = vpop.permute.xlu0 %458
      %460 = vrot.lane.b32.xlu0 %v455, 110
      %v461 = vpop.permute.xlu0 %460
      %vm462 = vcmask 900096
      %v463 = vsel %vm462, %v457, %v459
      %v464 = vsel %vm462, %v459, %v461
      %467 = vst [vmem:[#allocation3 + $0x20] sm:$0xf0] %v463
      %468 = vst [vmem:[#allocation3 + $0x28] sm:$0xf0] %v464
      %v469 = vld [vmem:[#allocation2] sm:$0xff]
      %v470 = vld [vmem:[#allocation2 + $0x8] sm:$0xf]
      %471 = vrot.lane.b32.xlu0 %v320, 32
      %v472 = vpop.permute.xlu0 %471
      %v473 = vrot.slane %v472, 4
      %vm474 = vcmask 261120
      %v475 = vsel %vm474, %v473, %v472
      %v478 = vmul.f32 %v469, %v475
      %v479 = vmul.f32 %v470, %v473
      %v482 = vcombine.high %v478, %v478
      %483 = vrot.lane.b32.xlu0 %v478, 96
      %v484 = vpop.permute.xlu0 %483
      %485 = vrot.lane.b32.xlu0 %v482, 96
      %v486 = vpop.permute.xlu0 %485
      %487 = vrot.lane.b32.xlu0 %v479, 96
      %v488 = vpop.permute.xlu0 %487
      %vm489 = vcmask 785408
      %v490 = vsel %vm489, %v484, %v486
      %v491 = vsel %vm489, %v486, %v488
      %494 = vst [vmem:[#allocation3 + $0x30] sm:$0xf] %v490
      %495 = vst [vmem:[#allocation3 + $0x38] sm:$0xf] %v491
      %v496 = vld [vmem:[#allocation2] sm:$0xff]
      %v497 = vld [vmem:[#allocation2 + $0x8] sm:$0xf]
      %v500 = vcombine.low %v496, %v496
      %v501 = vcombine.low %v497, %v497
      %502 = vrot.lane.b32.xlu0 %v500, 95
      %v503 = vpop.permute.xlu0 %502
      %504 = vrot.lane.b32.xlu0 %v496, 95
      %v505 = vpop.permute.xlu0 %504
      %506 = vrot.lane.b32.xlu0 %v501, 95
      %v507 = vpop.permute.xlu0 %506
      %vm508 = vcmask 777216
      %v509 = vsel %vm508, %v503, %v505
      %v510 = vsel %vm508, %v505, %v507
      %513 = vst [vmem:[#allocation3 + $0x30] sm:$0xf0] %v509
      %514 = vst [vmem:[#allocation3 + $0x38] sm:$0xf0] %v510
      %v515 = vld [vmem:[#allocation2] sm:$0xff]
      %v516 = vld [vmem:[#allocation2 + $0x8] sm:$0xf]
      %517 = vrot.lane.b32.xlu0 %v369, 34
      %v518 = vpop.permute.xlu0 %517
      %v519 = vrot.slane %v518, 4
      %vm520 = vcmask 277504
      %v521 = vsel %vm520, %v519, %v518
      %v524 = vmul.f32 %v515, %v521
      %v525 = vmul.f32 %v516, %v519
      %v528 = vcombine.high %v524, %v524
      %529 = vrot.lane.b32.xlu0 %v524, 94
      %v530 = vpop.permute.xlu0 %529
      %531 = vrot.lane.b32.xlu0 %v528, 94
      %v532 = vpop.permute.xlu0 %531
      %533 = vrot.lane.b32.xlu0 %v525, 94
      %v534 = vpop.permute.xlu0 %533
      %vm535 = vcmask 769024
      %v536 = vsel %vm535, %v530, %v532
      %v537 = vsel %vm535, %v532, %v534
      %540 = vst [vmem:[#allocation3 + $0x40] sm:$0xf] %v536
      %541 = vst [vmem:[#allocation3 + $0x48] sm:$0xf] %v537
      %v542 = vld [vmem:[%s1] sm:$0xff]
      %v543 = vld [vmem:[#allocation3] sm:$0xff]
      %v544 = vld [vmem:[#allocation3 + $0x8] sm:$0xff]
      %v545 = vld [vmem:[#allocation3 + $0x10] sm:$0xff]
      %v546 = vld [vmem:[#allocation3 + $0x18] sm:$0xff]
      %v547 = vld [vmem:[#allocation3 + $0x20] sm:$0xff]
      %v548 = vld [vmem:[#allocation3 + $0x28] sm:$0xff]
      %v549 = vld [vmem:[#allocation3 + $0x30] sm:$0xff]
      %v550 = vld [vmem:[#allocation3 + $0x38] sm:$0xff]
      %v551 = vld [vmem:[#allocation3 + $0x40] sm:$0xf]
      %v552 = vld [vmem:[#allocation3 + $0x48] sm:$0xf]
      %v553 = vld [vmem:[%s2] sm:$0xff]
      %555 = vset.pattern.permute.xlu0 0
      %556 = vperm.xlu0 %555, %v553
      %v557 = vpop.permute.xlu0 %556
      %vm559 = vcmask 293888
      %v561 = vsel %vm559, %v542, 0
      %vm563 = vcmask 1043456
      %v565 = vsel %vm563, %v551, 0
      %v568 = vsel %vm563, %v552, 0
      %570 = vmatprep.subr.mxu0 %v544
      %571 = vmatpush1.msra.mxu0 %v543
      %572 = vmatprep.subr.mxu0 %v546
      %573 = vmatpush1.msra.mxu0 %v545
      %574 = vmatprep.subr.mxu0 %v548
      %575 = vmatpush1.msra.mxu0 %v547
      %576 = vmatprep.subr.mxu0 %v550
      %577 = vmatpush1.msra.mxu0 %v549
      %578 = vmatprep.subr.mxu0 %v568
      %579 = vmatpush1.msra.mxu0 %v565
      %580 = vmatprep.subr.mxu0 0.0
      %581 = vmatpush1.msra.mxu0 0.0
      %582 = vmatprep.subr.mxu0 0.0
      %583 = vmatpush1.msra.mxu0 0.0
      %584 = vmatprep.subr.mxu0 0.0
      %585 = vmatpush1.msra.mxu0 0.0
      %586 = vmatprep.subr.mxu0 0.0
      %587 = vmatpush1.msra.mxu0 0.0
      %588 = vmatprep.subr.mxu0 0.0
      %589 = vmatpush1.msra.mxu0 0.0
      %590 = vmatprep.subr.mxu0 0.0
      %591 = vmatpush1.msra.mxu0 0.0
      %592 = vmatprep.subr.mxu0 0.0
      %593 = vmatpush1.msra.mxu0 0.0
      %594 = vmatprep.subr.mxu0 0.0
      %595 = vmatpush1.msra.mxu0 0.0
      %596 = vmatprep.subr.mxu0 0.0
      %597 = vmatpush1.msra.mxu0 0.0
      %598 = vmatprep.subr.mxu0 0.0
      %599 = vmatpush1.msra.mxu0 0.0
      %600 = vmatprep.subr.mxu0 0.0
      %601 = vmatpush1.msra.mxu0 0.0
      %602 = vmatprep.subr.mxu0 0.0
      %603 = vmatpush1.msra.mxu0 0.0
      %604 = vmatprep.subr.mxu0 0.0
      %605 = vmatpush1.msra.mxu0 0.0
      %606 = vmatprep.subr.mxu0 0.0
      %607 = vmatpush1.msra.mxu0 0.0
      %608 = vmatprep.subr.mxu0 0.0
      %609 = vmatpush1.msra.mxu0 0.0
      %610 = vmatprep.subr.mxu0 0.0
      %611 = vmatpush1.msra.mxu0 0.0
      %612 = vmatprep.subr.mxu0 0.0
      %613 = vmatpush1.msra.mxu0 0.0
      %614 = vmatprep.subr.mxu0 0.0
      %615 = vmatpush1.msra.mxu0 0.0
      %616 = vmatprep.subr.mxu0 0.0
      %617 = vmatpush1.msra.mxu0 0.0
      %618 = vmatprep.subr.mxu0 0.0
      %619 = vmatpush1.msra.mxu0 0.0
      %620 = vmatprep.subr.mxu0 0.0
      %621 = vmatpush1.msra.mxu0 0.0
      %622 = vmatprep.subr.mxu0 0.0
      %623 = vmatpush1.msra.mxu0 0.0
      %624 = vmatprep.subr.mxu0 0.0
      %625 = vmatpush1.msra.mxu0 0.0
      %626 = vmatprep.subr.mxu0 0.0
      %627 = vmatpush1.msra.mxu0 0.0
      %628 = vmatprep.subr.mxu0 0.0
      %629 = vmatpush1.msra.mxu0 0.0
      %630 = vmatprep.subr.mxu0 0.0
      %631 = vmatpush1.msra.mxu0 0.0
      %632 = vmatprep.subr.mxu0 0.0
      %633 = vmatpush1.msra.mxu0 0.0
      %634 = vmatprep.mubr.f32.mxu0 0.0
      %635 = vmatmul.mubr.f32.gmra.mrb[0].mxu0 %v561
      %v636 = vpop.f32.mrb[0].mxu0
      %v637 = vadd.f32 %v557, %v636
      %v638 = vpop.f32.mrb[0].mxu0
      %v639 = vadd.f32 %v557, %v638
      %640 = vdwg.mxu0
      %v641 = vmax.f32 %v637, 0.0
      %v642 = vmax.f32 %v639, 0.0
      %643 = vst.msk [vmem:[#allocation4] sm:$0xff] %vm288, 0.0
      %vm644 = vcmask 277640
      %645 = vst.msk [vmem:[#allocation4 + $0x10] sm:$0xff] %vm644, 0.0
      %648 = vrot.lane.b32.xlu0 %v641, 17
      %v649 = vpop.permute.xlu0 %648
      %650 = vrot.lane.b32.xlu0 %v642, 17
      %v651 = vpop.permute.xlu0 %650
      %v652 = vsel %vm288, %v649, %v651
      %vm656 = vcmask 1047688
      %657 = vst.msk [vmem:[#allocation4] sm:$0xff] %vm656, %v649
      %658 = vst [vmem:[#allocation4 + $0x8] sm:$0xff] %v652
      %659 = vst.msk [vmem:[#allocation4 + $0x10] sm:$0xff] %vm288, %v651
      %v660 = vld [vmem:[%s6] sm:$0x77]
      %v661 = vld [vmem:[#allocation4] sm:$0xff]
      %v662 = vld [vmem:[#allocation4 + $0x8] sm:$0xff]
      %v664 = vlaneseq
      %v665 = vshrl.u32 %v664, 7
      %v666 = vsub.s32 0, %v665
      %v667 = vrot.slane %v660, %v666
      %v668 = vlaneseq
      %v669 = vshrl.u32 %v668, 7
      %v670 = vsub.s32 4, %v669
      %v671 = vrot.slane %v660, %v670
      %v674 = vlaneseq
      %v675 = vshrl.u32 %v674, 7
      %v676 = vsub.s32 0, %v675
      %v677 = vrot.slane %v667, %v676
      %v678 = vlaneseq
      %v679 = vshrl.u32 %v678, 7
      %v680 = vsub.s32 0, %v679
      %v681 = vrot.slane %v671, %v680
      %v682 = vmul.f32 %v661, %v677
      %v683 = vmul.f32 %v662, %v681
      %684 = vst [vmem:[#allocation5] sm:$0xff] %v682
      %685 = vst [vmem:[#allocation5 + $0x8] sm:$0xff] %v683
      %v686 = vld [vmem:[#allocation4] sm:$0xff]
      %v687 = vld [vmem:[#allocation4 + $0x8] sm:$0xff]
      %v688 = vld [vmem:[#allocation4 + $0x10] sm:$0xff]
      %692 = vrot.lane.b32.xlu0 %v686, 127
      %v693 = vpop.permute.xlu0 %692
      %694 = vrot.lane.b32.xlu0 %v687, 127
      %v695 = vpop.permute.xlu0 %694
      %696 = vrot.lane.b32.xlu0 %v688, 127
      %v697 = vpop.permute.xlu0 %696
      %v698 = vsel %vm340, %v693, %v695
      %v699 = vsel %vm340, %v695, %v697
      %702 = vst [vmem:[#allocation5 + $0x10] sm:$0xff] %v698
      %703 = vst [vmem:[#allocation5 + $0x18] sm:$0xff] %v699
      %v704 = vld [vmem:[#allocation4] sm:$0xff]
      %v705 = vld [vmem:[#allocation4 + $0x8] sm:$0xff]
      %v706 = vld [vmem:[#allocation4 + $0x10] sm:$0xff]
      %v707 = vlaneseq
      %v708 = vshrl.u32 %v707, 7
      %v709 = vsub.s32 2, %v708
      %v710 = vrot.slane %v660, %v709
      %v711 = vlaneseq
      %v712 = vshrl.u32 %v711, 7
      %v713 = vsub.s32 6, %v712
      %v714 = vrot.slane %v660, %v713
      %v717 = vlaneseq
      %v718 = vshrl.u32 %v717, 7
      %v719 = vsub.s32 2, %v718
      %v720 = vrot.slane %v710, %v719
      %v721 = vlaneseq
      %v722 = vshrl.u32 %v721, 7
      %v723 = vsub.s32 2, %v722
      %v724 = vrot.slane %v714, %v723
      %727 = vrot.lane.b32.xlu0 %v720, 2
      %v728 = vpop.permute.xlu0 %727
      %729 = vrot.lane.b32.xlu0 %v724, 2
      %v730 = vpop.permute.xlu0 %729
      %v731 = vsel %vm373, %v728, %v730
      %v735 = vmul.f32 %v704, %v728
      %v736 = vmul.f32 %v705, %v731
      %v737 = vmul.f32 %v706, %v730
      %741 = vrot.lane.b32.xlu0 %v735, 126
      %v742 = vpop.permute.xlu0 %741
      %743 = vrot.lane.b32.xlu0 %v736, 126
      %v744 = vpop.permute.xlu0 %743
      %745 = vrot.lane.b32.xlu0 %v737, 126
      %v746 = vpop.permute.xlu0 %745
      %v747 = vsel %vm388, %v742, %v744
      %v748 = vsel %vm388, %v744, %v746
      %751 = vst [vmem:[#allocation5 + $0x20] sm:$0xff] %v747
      %752 = vst [vmem:[#allocation5 + $0x28] sm:$0xff] %v748
      %v753 = vld [vmem:[#allocation4] sm:$0xff]
      %v754 = vld [vmem:[#allocation4 + $0x8] sm:$0xff]
      %v755 = vld [vmem:[#allocation4 + $0x10] sm:$0xff]
      %758 = vrot.lane.b32.xlu0 %v677, 16
      %v759 = vpop.permute.xlu0 %758
      %760 = vrot.lane.b32.xlu0 %v681, 16
      %v761 = vpop.permute.xlu0 %760
      %v762 = vsel %vm400, %v759, %v761
      %v766 = vmul.f32 %v753, %v759
      %v767 = vmul.f32 %v754, %v762
      %v768 = vmul.f32 %v755, %v761
      %772 = vrot.lane.b32.xlu0 %v766, 112
      %v773 = vpop.permute.xlu0 %772
      %774 = vrot.lane.b32.xlu0 %v767, 112
      %v775 = vpop.permute.xlu0 %774
      %776 = vrot.lane.b32.xlu0 %v768, 112
      %v777 = vpop.permute.xlu0 %776
      %v778 = vsel %vm416, %v773, %v775
      %v779 = vsel %vm416, %v775, %v777
      %782 = vst [vmem:[#allocation5 + $0x30] sm:$0xff] %v778
      %783 = vst [vmem:[#allocation5 + $0x38] sm:$0xff] %v779
      %v784 = vld [vmem:[#allocation4] sm:$0xff]
      %v785 = vld [vmem:[#allocation4 + $0x8] sm:$0xff]
      %v786 = vld [vmem:[#allocation4 + $0x10] sm:$0xff]
      %790 = vrot.lane.b32.xlu0 %v784, 111
      %v791 = vpop.permute.xlu0 %790
      %792 = vrot.lane.b32.xlu0 %v785, 111
      %v793 = vpop.permute.xlu0 %792
      %794 = vrot.lane.b32.xlu0 %v786, 111
      %v795 = vpop.permute.xlu0 %794
      %v796 = vsel %vm434, %v791, %v793
      %v797 = vsel %vm434, %v793, %v795
      %800 = vst [vmem:[#allocation5 + $0x40] sm:$0xff] %v796
      %801 = vst [vmem:[#allocation5 + $0x48] sm:$0xff] %v797
      %v802 = vld [vmem:[#allocation4] sm:$0xff]
      %v803 = vld [vmem:[#allocation4 + $0x8] sm:$0xff]
      %v804 = vld [vmem:[#allocation4 + $0x10] sm:$0xff]
      %805 = vrot.lane.b32.xlu0 %v720, 18
      %v806 = vpop.permute.xlu0 %805
      %807 = vrot.lane.b32.xlu0 %v724, 18
      %v808 = vpop.permute.xlu0 %807
      %v809 = vsel %vm446, %v806, %v808
      %v813 = vmul.f32 %v802, %v806
      %v814 = vmul.f32 %v803, %v809
      %v815 = vmul.f32 %v804, %v808
      %819 = vrot.lane.b32.xlu0 %v813, 110
      %v820 = vpop.permute.xlu0 %819
      %821 = vrot.lane.b32.xlu0 %v814, 110
      %v822 = vpop.permute.xlu0 %821
      %823 = vrot.lane.b32.xlu0 %v815, 110
      %v824 = vpop.permute.xlu0 %823
      %v825 = vsel %vm462, %v820, %v822
      %v826 = vsel %vm462, %v822, %v824
      %829 = vst [vmem:[#allocation5 + $0x50] sm:$0xff] %v825
      %830 = vst [vmem:[#allocation5 + $0x58] sm:$0xff] %v826
      %v831 = vld [vmem:[#allocation4] sm:$0xff]
      %v832 = vld [vmem:[#allocation4 + $0x8] sm:$0xff]
      %v833 = vld [vmem:[#allocation4 + $0x10] sm:$0xff]
      %834 = vrot.lane.b32.xlu0 %v677, 32
      %v835 = vpop.permute.xlu0 %834
      %836 = vrot.lane.b32.xlu0 %v681, 32
      %v837 = vpop.permute.xlu0 %836
      %v838 = vsel %vm474, %v835, %v837
      %v842 = vmul.f32 %v831, %v835
      %v843 = vmul.f32 %v832, %v838
      %v844 = vmul.f32 %v833, %v837
      %848 = vrot.lane.b32.xlu0 %v842, 96
      %v849 = vpop.permute.xlu0 %848
      %850 = vrot.lane.b32.xlu0 %v843, 96
      %v851 = vpop.permute.xlu0 %850
      %852 = vrot.lane.b32.xlu0 %v844, 96
      %v853 = vpop.permute.xlu0 %852
      %v854 = vsel %vm489, %v849, %v851
      %v855 = vsel %vm489, %v851, %v853
      %858 = vst [vmem:[#allocation5 + $0x60] sm:$0xff] %v854
      %859 = vst [vmem:[#allocation5 + $0x68] sm:$0xff] %v855
      %v860 = vld [vmem:[#allocation4] sm:$0xff]
      %v861 = vld [vmem:[#allocation4 + $0x8] sm:$0xff]
      %v862 = vld [vmem:[#allocation4 + $0x10] sm:$0xff]
      %866 = vrot.lane.b32.xlu0 %v860, 95
      %v867 = vpop.permute.xlu0 %866
      %868 = vrot.lane.b32.xlu0 %v861, 95
      %v869 = vpop.permute.xlu0 %868
      %870 = vrot.lane.b32.xlu0 %v862, 95
      %v871 = vpop.permute.xlu0 %870
      %v872 = vsel %vm508, %v867, %v869
      %v873 = vsel %vm508, %v869, %v871
      %876 = vst [vmem:[#allocation5 + $0x70] sm:$0xff] %v872
      %877 = vst [vmem:[#allocation5 + $0x78] sm:$0xff] %v873
      %v878 = vld [vmem:[#allocation4] sm:$0xff]
      %v879 = vld [vmem:[#allocation4 + $0x8] sm:$0xff]
      %v880 = vld [vmem:[#allocation4 + $0x10] sm:$0xff]
      %881 = vrot.lane.b32.xlu0 %v720, 34
      %v882 = vpop.permute.xlu0 %881
      %883 = vrot.lane.b32.xlu0 %v724, 34
      %v884 = vpop.permute.xlu0 %883
      %v885 = vsel %vm520, %v882, %v884
      %v889 = vmul.f32 %v878, %v882
      %v890 = vmul.f32 %v879, %v885
      %v891 = vmul.f32 %v880, %v884
      %895 = vrot.lane.b32.xlu0 %v889, 94
      %v896 = vpop.permute.xlu0 %895
      %897 = vrot.lane.b32.xlu0 %v890, 94
      %v898 = vpop.permute.xlu0 %897
      %899 = vrot.lane.b32.xlu0 %v891, 94
      %v900 = vpop.permute.xlu0 %899
      %v901 = vsel %vm535, %v896, %v898
      %v902 = vsel %vm535, %v898, %v900
      %905 = vst [vmem:[#allocation5 + $0x80] sm:$0xff] %v901
      %906 = vst [vmem:[#allocation5 + $0x88] sm:$0xff] %v902
      %v907 = vld [vmem:[%s3] sm:$0xff]
      %v908 = vld [vmem:[#allocation5] sm:$0xff]
      %v909 = vld [vmem:[#allocation5 + $0x8] sm:$0xff]
      %v910 = vld [vmem:[#allocation5 + $0x10] sm:$0xff]
      %v911 = vld [vmem:[#allocation5 + $0x18] sm:$0xff]
      %v912 = vld [vmem:[#allocation5 + $0x20] sm:$0xff]
      %v913 = vld [vmem:[#allocation5 + $0x28] sm:$0xff]
      %v914 = vld [vmem:[#allocation5 + $0x30] sm:$0xff]
      %v915 = vld [vmem:[#allocation5 + $0x38] sm:$0xff]
      %v916 = vld [vmem:[#allocation5 + $0x40] sm:$0xff]
      %v917 = vld [vmem:[#allocation5 + $0x48] sm:$0xff]
      %v918 = vld [vmem:[#allocation5 + $0x50] sm:$0xff]
      %v919 = vld [vmem:[#allocation5 + $0x58] sm:$0xff]
      %v920 = vld [vmem:[#allocation5 + $0x60] sm:$0xff]
      %v921 = vld [vmem:[#allocation5 + $0x68] sm:$0xff]
      %v922 = vld [vmem:[#allocation5 + $0x70] sm:$0xff]
      %v923 = vld [vmem:[#allocation5 + $0x78] sm:$0xff]
      %v924 = vld [vmem:[#allocation5 + $0x80] sm:$0xff]
      %v925 = vld [vmem:[#allocation5 + $0x88] sm:$0xff]
      %v926 = vld [vmem:[%s4] sm:$0xff]
      %928 = vset.pattern.permute.xlu0 0
      %929 = vperm.xlu0 %928, %v926
      %v930 = vpop.permute.xlu0 %929
      %vm932 = vcmask 588800
      %v934 = vsel %vm932, %v907, 0
      %936 = vmatprep.subr.mxu0 %v909
      %937 = vmatpush1.msra.mxu0 %v908
      %938 = vmatprep.subr.mxu0 %v911
      %939 = vmatpush1.msra.mxu0 %v910
      %940 = vmatprep.subr.mxu0 %v913
      %941 = vmatpush1.msra.mxu0 %v912
      %942 = vmatprep.subr.mxu0 %v915
      %943 = vmatpush1.msra.mxu0 %v914
      %944 = vmatprep.subr.mxu0 %v917
      %945 = vmatpush1.msra.mxu0 %v916
      %946 = vmatprep.subr.mxu0 %v919
      %947 = vmatpush1.msra.mxu0 %v918
      %948 = vmatprep.subr.mxu0 %v921
      %949 = vmatpush1.msra.mxu0 %v920
      %950 = vmatprep.subr.mxu0 %v923
      %951 = vmatpush1.msra.mxu0 %v922
      %952 = vmatprep.subr.mxu0 %v925
      %953 = vmatpush1.msra.mxu0 %v924
      %954 = vmatprep.subr.mxu0 0.0
      %955 = vmatpush1.msra.mxu0 0.0
      %956 = vmatprep.subr.mxu0 0.0
      %957 = vmatpush1.msra.mxu0 0.0
      %958 = vmatprep.subr.mxu0 0.0
      %959 = vmatpush1.msra.mxu0 0.0
      %960 = vmatprep.subr.mxu0 0.0
      %961 = vmatpush1.msra.mxu0 0.0
      %962 = vmatprep.subr.mxu0 0.0
      %963 = vmatpush1.msra.mxu0 0.0
      %964 = vmatprep.subr.mxu0 0.0
      %965 = vmatpush1.msra.mxu0 0.0
      %966 = vmatprep.subr.mxu0 0.0
      %967 = vmatpush1.msra.mxu0 0.0
      %968 = vmatprep.subr.mxu0 0.0
      %969 = vmatpush1.msra.mxu0 0.0
      %970 = vmatprep.subr.mxu0 0.0
      %971 = vmatpush1.msra.mxu0 0.0
      %972 = vmatprep.subr.mxu0 0.0
      %973 = vmatpush1.msra.mxu0 0.0
      %974 = vmatprep.subr.mxu0 0.0
      %975 = vmatpush1.msra.mxu0 0.0
      %976 = vmatprep.subr.mxu0 0.0
      %977 = vmatpush1.msra.mxu0 0.0
      %978 = vmatprep.subr.mxu0 0.0
      %979 = vmatpush1.msra.mxu0 0.0
      %980 = vmatprep.subr.mxu0 0.0
      %981 = vmatpush1.msra.mxu0 0.0
      %982 = vmatprep.subr.mxu0 0.0
      %983 = vmatpush1.msra.mxu0 0.0
      %984 = vmatprep.subr.mxu0 0.0
      %985 = vmatpush1.msra.mxu0 0.0
      %986 = vmatprep.subr.mxu0 0.0
      %987 = vmatpush1.msra.mxu0 0.0
      %988 = vmatprep.subr.mxu0 0.0
      %989 = vmatpush1.msra.mxu0 0.0
      %990 = vmatprep.subr.mxu0 0.0
      %991 = vmatpush1.msra.mxu0 0.0
      %992 = vmatprep.subr.mxu0 0.0
      %993 = vmatpush1.msra.mxu0 0.0
      %994 = vmatprep.subr.mxu0 0.0
      %995 = vmatpush1.msra.mxu0 0.0
      %996 = vmatprep.subr.mxu0 0.0
      %997 = vmatpush1.msra.mxu0 0.0
      %998 = vmatprep.subr.mxu0 0.0
      %999 = vmatpush1.msra.mxu0 0.0
      %1000 = vmatprep.mubr.f32.mxu0 0.0
      %1001 = vmatmul.mubr.f32.gmra.mrb[0].mxu0 %v934
      %v1002 = vpop.f32.mrb[0].mxu0
      %v1003 = vadd.f32 %v930, %v1002
      %v1004 = vpop.f32.mrb[0].mxu0
      %v1005 = vadd.f32 %v930, %v1004
      %1006 = vdwg.mxu0
      %v1007 = vmax.f32 %v1003, 0.0
      %v1008 = vmax.f32 %v1005, 0.0
      %1009 = vst [vmem:[%s278] sm:$0xff] %v1007
      %1010 = vst [vmem:[%s278 + $0x8] sm:$0xff] %v1008
      %p1011 = scmp.lt.s32.totalorder %s18, 1
      %s1012 = scalar_select %p1011, %s18, 1
      %s1013 = smul.addr %s1012, 2
      %s1014 = smul.addr %s1013, 8
      %s1015 = scalar_lea.vmem %s7, %s1014
      // Predicated region
      $region49: #{double_conv_forward.1} parent=47 // pred_check
        %p1016 = pneg %p188
      $region50: #{double_conv_forward.1} parent=47 // pred_check_branch
        %1018 = sbr.rel (%p1016) target = $region52
      $region51: #{double_conv_forward.1} parent=47 // pred_region
        _
      $region52: #{double_conv_forward.1} parent=47 // pred_fallthru
        _
    $region48: #{double_conv_forward.1} parent=5 // pred_fallthru
      _
    %p1019 = scmp.le.s32.totalorder 2, %s13
    // Predicated region
    $region53: #{double_conv_forward.1} parent=5 // pred_check
      %p1020 = pneg %p1019
    $region54: #{double_conv_forward.1} parent=5 // pred_check_branch
      %1022 = sbr.rel (%p1020) target = $region56
    $region55: #{double_conv_forward.1} parent=5 // pred_region
      %s1023 = ssub.s32 %s13, 2
      // Predicated region
      $region57: #{double_conv_forward.1} parent=55 // pred_check
        %p1024 = pneg %p194
      $region58: #{double_conv_forward.1} parent=55 // pred_check_branch
        %1026 = sbr.rel (%p1024) target = $region60
      $region59: #{double_conv_forward.1} parent=55 // pred_region
        %p1027 = scmp.lt.s32.totalorder %s19, 1
        %s1028 = scalar_select %p1027, %s19, 1
        %s1029 = smul.addr %s1028, 2
        %s1030 = smul.addr %s1029, 8
        %s1031 = scalar_lea.vmem %s7, %s1030
      $region60: #{double_conv_forward.1} parent=55 // pred_fallthru
        _
    $region56: #{double_conv_forward.1} parent=5 // pred_fallthru
      _
  $region6: #{double_conv_forward.1} parent=0 // loop_footer
    %s17 = sadd.s32 1, %s13
  $region7: #{double_conv_forward.1} parent=0 // loop_footer_branch
    %12 = sbr.rel target = $region3
  $region8: #{double_conv_forward.1} parent=0 // loop_exit
    _

</llo_original>
